<compile_context>
chip_gen: v6e
topology: v6e:2x2x1
jax: 0.10.0
libtpu: 0.0.40
codegen_flags: <defaults>
</compile_context>

<pallas_src>
import functools

import jax
import jax.numpy as jnp
from jax.experimental import pallas as pl
from jax.experimental.pallas import tpu as pltpu


# ---------------------------------------------------------------------------
# Kernel
# ---------------------------------------------------------------------------
def _mask_kernel(x_ref, o_ref, *, mask_token, direction):
    """Elementwise (x == token) or (x != token), stored in the output dtype."""
    x = x_ref[...]
    if direction == "equal":
        m = x == mask_token
    else:
        m = x != mask_token
    o_ref[...] = m.astype(o_ref.dtype)


# Tile targets: bytes of *input* (int32) per grid step.
_TILE_BYTES_BOOL = 8 * 1024 * 1024   # bool/int8 out: 2*(8 + 2)  MiB buffered
_TILE_BYTES_INT = 4 * 1024 * 1024    # int32 out:     2*(4 + 4)  MiB buffered
_VMEM_LIMIT_BYTES = 28 * 1024 * 1024  # > worst-case 20 MiB, << 64 MiB v7x physical
_SPLIT_BYTES = 4 * 1024 * 1024        # force >=2 grid blocks above this size


def _choose_layout(n):
    """Pick (rows, cols): cols a multiple of 128, prefer rows % 8 == 0 and rows >= 8.

    Returns None if n is not divisible by 128 (caller falls back to XLA).
    """
    best = None
    for cols in (1024, 512, 256, 128):
        if n % cols:
            continue
        rows = n // cols
        key = (rows % 8 == 0 and rows >= 8, rows >= 8, cols)
        if best is None or key > best[0]:
            best = (key, rows, cols)
    if best is None:
        return None
    return best[1], best[2]


@functools.lru_cache(maxsize=None)
def _bool_output_supported():
    """Probe once whether Mosaic accepts i1 (bool) stores from this kernel."""
    try:
        with jax.ensure_compile_time_eval():
            probe = pl.pallas_call(
                functools.partial(_mask_kernel, mask_token=0, direction="equal"),
                out_shape=jax.ShapeDtypeStruct((8, 128), jnp.bool_),
            )(jnp.zeros((8, 128), jnp.int32))
            probe = jax.block_until_ready(probe)
            return bool(jnp.all(probe))
    except Exception:
        return False


def _xla_mask(x, mask_token, dtype, direction):
    m = (x == mask_token) if direction == "equal" else (x != mask_token)
    return m.astype(jnp.int32) if dtype == "int" else m


def mask_maker(x, mask_token, dtype="bool", direction="equal"):
    """Pallas implementation of MaskMaker.forward.

    x          : integer token tensor of any shape. Kernel path for int32/uint32;
                 other widths (e.g. int64 under x64) use a plain XLA compare to
                 avoid a full-tensor pre-convert pass and truncation aliasing.
    mask_token : static Python int.
    dtype      : 'bool' or 'int' (anything else behaves like 'bool', as in torch).
    direction  : 'equal' or anything else ('not equal').
    """
    x = jnp.asarray(x)
    orig_shape = x.shape
    n = x.size
    mask_token = int(mask_token)  # static, matches the nn.Module attribute

    # XLA fallback for: empty tensors, sizes not divisible by 128 (avoids the
    # full-tensor pad + slice, which would ~double HBM traffic), and non-32-bit
    # integer inputs. The compare itself is also bandwidth-bound in XLA, so the
    # fallback matches kernel-path traffic for these cases.
    layout = _choose_layout(n) if n else None
    if layout is None or x.dtype not in (jnp.int32, jnp.uint32):
        return _xla_mask(x, mask_token, dtype, direction)

    rows, cols = layout
    x2 = x.reshape(rows, cols)
    itemsize = x.dtype.itemsize  # 4

    if dtype == "int":
        out_dtype = jnp.int32            # torch .to(torch.int) -> int32
        tile_bytes = _TILE_BYTES_INT
    else:
        # Store bool directly when supported; otherwise int8 0/1 + glue cast.
        out_dtype = jnp.bool_ if _bool_output_supported() else jnp.int8
        tile_bytes = _TILE_BYTES_BOOL
    out_itemsize = jnp.dtype(out_dtype).itemsize

    # Row-block sized for the target tile bytes (multiple of 8 sublanes).
    br_target = max(8, ((tile_bytes // (cols * itemsize)) // 8) * 8)
    if rows % 8 == 0:
        br = min(br_target, rows)
        # Guarantee >=2 grid blocks for large tensors so the "parallel" axis can
        # shard across v7x's two TensorCores instead of serializing on one.
        if br == rows and rows >= 16 and n * itemsize >= _SPLIT_BYTES:
            br = max(8, ((rows // 2) // 8) * 8)
    elif rows <= br_target:
        br = rows                        # full-extent block (always legal)
    else:
        br = br_target                   # multiple-of-8 block; Pallas masks the tail
    num_blocks = pl.cdiv(rows, br)

    kernel = functools.partial(
        _mask_kernel, mask_token=mask_token, direction=direction
    )

    out2 = pl.pallas_call(
        kernel,
        out_shape=jax.ShapeDtypeStruct((rows, cols), out_dtype),
        grid_spec=pltpu.PrefetchScalarGridSpec(
            num_scalar_prefetch=0,
            grid=(num_blocks,),
            in_specs=[pl.BlockSpec((br, cols), lambda i: (i, 0))],
            out_specs=pl.BlockSpec((br, cols), lambda i: (i, 0)),
        ),
        compiler_params=pltpu.CompilerParams(
            dimension_semantics=("parallel",),
            vmem_limit_bytes=_VMEM_LIMIT_BYTES,
        ),
        cost_estimate=pl.CostEstimate(
            flops=n,
            transcendentals=0,
            bytes_accessed=n * itemsize + n * out_itemsize,
        ),
    )(x2)

    out = out2.reshape(orig_shape)
    if dtype == "int":
        return out
    if out.dtype != jnp.bool_:
        out = out.astype(jnp.bool_)      # int8 0/1 -> bool fallback glue (1 B/elem)
    return out


def _reference(x, mask_token, dtype="bool", direction="equal"):
    if direction == "equal":
        m = x == mask_token
    else:
        m = x != mask_token
    if dtype == "int":
        return m.astype(jnp.int32)
    return m


if __name__ == "__main__":
    MASK_TOKEN = 3
    key = jax.random.PRNGKey(0)

    # Lane-friendly token tensor: batch=2, seq=8, width=128 (size % 128 == 0).
    x = jax.random.randint(key, (2, 8, 128), minval=0, maxval=10, dtype=jnp.int32)

    # direction='equal', dtype='bool'
    out_bool = jax.block_until_ready(
        mask_maker(x, MASK_TOKEN, dtype="bool", direction="equal"))
    ref_bool = _reference(x, MASK_TOKEN, dtype="bool", direction="equal")
    assert out_bool.dtype == jnp.bool_
    assert out_bool.shape == x.shape
    assert bool(jnp.all(out_bool == ref_bool))

    # direction='not_equal', dtype='int'
    out_int = jax.block_until_ready(
        mask_maker(x, MASK_TOKEN, dtype="int", direction="not_equal"))
    ref_int = _reference(x, MASK_TOKEN, dtype="int", direction="not_equal")
    assert out_int.dtype == jnp.int32
    assert out_int.shape == x.shape
    assert bool(jnp.all(out_int == ref_int))

    # Awkward shape (size not a multiple of 128): exercises the XLA fallback path.
    x_r = jax.random.randint(jax.random.PRNGKey(0), (3, 5, 7),
                             minval=0, maxval=5, dtype=jnp.int32)
    out_r = jax.block_until_ready(
        mask_maker(x_r, 2, dtype="bool", direction="equal"))
    assert out_r.shape == x_r.shape
    assert bool(jnp.all(out_r == _reference(x_r, 2, dtype="bool", direction="equal")))

    print("KERNEL_OK")
</pallas_src>

<mosaic_0001>
module attributes {stable_mosaic.version = 11 : i64} {
  func.func @_mask_kernel(%arg0: memref<8x128xi32, #tpu.memory_space<vmem>>, %arg1: memref<8x128xi32, #tpu.memory_space<vmem>>) attributes {dimension_semantics = [], scalar_prefetch = 0 : i64, scratch_operands = 0 : i64, tpu.core_type = #tpu.core_type<tc>} {
    %c0 = arith.constant 0 : index
    %c0_0 = arith.constant 0 : index
    %0 = vector.load %arg0[%c0, %c0_0] : memref<8x128xi32, #tpu.memory_space<vmem>>, vector<8x128xi32>
    %c0_i32 = arith.constant 0 : i32
    %1 = vector.broadcast %c0_i32 : i32 to vector<8x128xi32>
    %2 = arith.cmpi eq, %0, %1 : vector<8x128xi32>
    %c0_1 = arith.constant 0 : index
    %c0_2 = arith.constant 0 : index
    %3 = vector.load %arg1[%c0_1, %c0_2] : memref<8x128xi32, #tpu.memory_space<vmem>>, vector<8x128xi32>
    %4 = arith.extui %2 : vector<8x128xi1> to vector<8x128xi32>
    %cst = arith.constant dense<0> : vector<8x128xi32>
    %5 = arith.cmpi ne, %3, %cst : vector<8x128xi32>
    tpu.vector_store %arg1[%c0_1, %c0_2], %4 {strides = array<i32>} : memref<8x128xi32, #tpu.memory_space<vmem>>, vector<8x128xi32>,
    return
  }
}

module attributes {stable_mosaic.version = 11 : i64} {
  func.func @_mask_kernel(%arg0: i32, %arg1: memref<8x256xi32, #tpu.memory_space<vmem>>, %arg2: memref<8x256xi8, #tpu.memory_space<vmem>>) attributes {dimension_semantics = [#tpu.dimension_semantics<parallel>], iteration_bounds = array<i64: 1>, scalar_prefetch = 0 : i64, scratch_operands = 0 : i64, tpu.core_type = #tpu.core_type<tc>, window_params = [{transform_indices = @transform_0, window_bounds = array<i64: 8, 256>}, {transform_indices = @transform_1, window_bounds = array<i64: 8, 256>}]} {
    %c0 = arith.constant 0 : index
    %c0_0 = arith.constant 0 : index
    %0 = vector.load %arg1[%c0, %c0_0] : memref<8x256xi32, #tpu.memory_space<vmem>>, vector<8x256xi32>
    %c3_i32 = arith.constant 3 : i32
    %1 = vector.broadcast %c3_i32 : i32 to vector<8x256xi32>
    %2 = arith.cmpi eq, %0, %1 : vector<8x256xi32>
    %3 = arith.extui %2 : vector<8x256xi1> to vector<8x256xi8>
    %c0_1 = arith.constant 0 : index
    %c0_2 = arith.constant 0 : index
    %4 = vector.load %arg2[%c0_1, %c0_2] : memref<8x256xi8, #tpu.memory_space<vmem>>, vector<8x256xi8>
    tpu.vector_store %arg2[%c0_1, %c0_2], %3 {strides = array<i32>} : memref<8x256xi8, #tpu.memory_space<vmem>>, vector<8x256xi8>,
    return
  }
  func.func @transform_0(%arg0: i32) -> (i32, i32) {
    %c0_i32 = arith.constant 0 : i32
    %c0_i32_0 = arith.constant 0 : i32
    return %arg0, %c0_i32 : i32, i32
  }
  func.func @transform_1(%arg0: i32) -> (i32, i32) {
    %c0_i32 = arith.constant 0 : i32
    %c0_i32_0 = arith.constant 0 : i32
    return %arg0, %c0_i32 : i32, i32
  }
}

</mosaic_0001>

<llo_original>
// kernel: tpu_custom_call.1
$region0: #{tpu_custom_call.1}
  #allocation0 [shape = 'u32[]', space=smem, size = 0x4, offset = 0x4, fixed_abs, tag = 'smem constant byte address 0x4 - core index']
  #allocation1 [shape = 'u32[144,128]{1,0:T(1,128)}', space=vmem, size = 0x12000, scoped, tag = 'internal scratch']
  %s0 = inlined_call_operand.hbm [shape: s32[8,128], index: 0, kind: input, shape index: {}]
  %s1 = inlined_call_operand.vmem [shape: s32[8,128], index: 1, kind: output, shape index: {}]
  %s2 = sld [smem:[#allocation0]]
  $region18: #{tpu_custom_call.1} parent=0
    _
  %s4 = ssub.s32 1, %s2
  %s5 = scalar_select 0, %s4, %s2
  $region1: #{tpu_custom_call.1} parent=0
    #allocation2 [shape = 'u8[4096]{0}', space=vmem, size = 0x1000, scoped, tag = 'input window, operand 0, single buffered']
    #allocation3 [shape = 's32[1]{0}', space=sflag, size = 0x4, scoped, tag = 'scoped memory for tpu_custom_call.1']
    %6 = vsyncpa [#allocation3], 0
    // Predicated region
    $region2: #{tpu_custom_call.1} parent=1 // pred_check
      _
    $region3: #{tpu_custom_call.1} parent=1 // pred_check_branch
      %8 = sbr.rel (0) target = $region5
    $region4: #{tpu_custom_call.1} parent=1 // pred_region
      %s10 = ssub.s32 128, 128
      %11 = vsyncadd [#allocation3], %s10
      %s13 = sshll.u32 [#allocation2], 4
      %s14 = int_to_ptr.vmem [resolvable:$true] %s13
      %16 = dma.hbm_to_vmem [thread:$0]  %s0, 128, %s14, [#allocation3]
    $region5: #{tpu_custom_call.1} parent=1 // pred_fallthru
      _
    // Predicated region
    $region6: #{tpu_custom_call.1} parent=1 // pred_check
      _
    $region7: #{tpu_custom_call.1} parent=1 // pred_check_branch
      %18 = sbr.rel (0) target = $region9
    $region8: #{tpu_custom_call.1} parent=1 // pred_region
      %19 = dma.done [#allocation3], 128
    $region9: #{tpu_custom_call.1} parent=1 // pred_fallthru
      _
    %v20 = vld [vmem:[#allocation2] sm:$0xff]
    %vm21 = vcmp.eq.s32.totalorder %v20, 0
    %v22 = vsel %vm21, 1, 0
    %23 = vst [vmem:[%s1] sm:$0xff] %v22
    // Predicated region
    $region10: #{tpu_custom_call.1} parent=1 // pred_check
      _
    $region11: #{tpu_custom_call.1} parent=1 // pred_check_branch
      %25 = sbr.rel (0) target = $region13
    $region12: #{tpu_custom_call.1} parent=1 // pred_region
      _
    $region13: #{tpu_custom_call.1} parent=1 // pred_fallthru
      _
    // Predicated region
    $region14: #{tpu_custom_call.1} parent=1 // pred_check
      _
    $region15: #{tpu_custom_call.1} parent=1 // pred_check_branch
      %27 = sbr.rel (0) target = $region17
    $region16: #{tpu_custom_call.1} parent=1 // pred_region
      _
    $region17: #{tpu_custom_call.1} parent=1 // pred_fallthru
      _
    %28 = vsyncpa [#allocation3], 1

// kernel: tpu_custom_call.1
$region0: #{tpu_custom_call.1}
  #allocation0 [shape = 'u32[]', space=smem, size = 0x4, offset = 0x4, fixed_abs, tag = 'smem constant byte address 0x4 - core index']
  #allocation1 [shape = 'u32[144,128]{1,0:T(1,128)}', space=vmem, size = 0x12000, scoped, tag = 'internal scratch']
  %s0 = inlined_call_operand.hbm [shape: s32[8,256], index: 0, kind: input, shape index: {}]
  %s1 = inlined_call_operand.hbm [shape: s8[8,256], index: 1, kind: output, shape index: {}]
  %s2 = sld [smem:[#allocation0]]
  $region18: #{tpu_custom_call.1} parent=0
    _
  %s4 = ssub.s32 1, %s2
  %s5 = scalar_select 0, %s4, %s2
  $region1: #{tpu_custom_call.1} parent=0
    #allocation2 [shape = 'u8[8192]{0}', space=vmem, size = 0x2000, scoped, tag = 'input window, operand 0, single buffered']
    #allocation3 [shape = 's32[1]{0}', space=sflag, size = 0x4, scoped, tag = 'scoped memory for tpu_custom_call.1']
    #allocation4 [shape = 's32[1]{0}', space=sflag, size = 0x4, scoped, tag = 'scoped memory for tpu_custom_call.1']
    #allocation5 [shape = 'u8[2048]{0}', space=vmem, size = 0x800, scoped, tag = 'output window, operand 0, single buffered']
    %6 = vsyncpa [#allocation3], 0
    %7 = vsyncpa [#allocation4], 0
    // Predicated region
    $region2: #{tpu_custom_call.1} parent=1 // pred_check
      _
    $region3: #{tpu_custom_call.1} parent=1 // pred_check_branch
      %9 = sbr.rel (0) target = $region5
    $region4: #{tpu_custom_call.1} parent=1 // pred_region
      %s11 = ssub.s32 256, 256
      %12 = vsyncadd [#allocation3], %s11
      %s14 = sshll.u32 [#allocation2], 4
      %s15 = int_to_ptr.vmem [resolvable:$true] %s14
      %17 = dma.hbm_to_vmem [thread:$0]  %s0, 256, %s15, [#allocation3]
    $region5: #{tpu_custom_call.1} parent=1 // pred_fallthru
      _
    // Predicated region
    $region6: #{tpu_custom_call.1} parent=1 // pred_check
      _
    $region7: #{tpu_custom_call.1} parent=1 // pred_check_branch
      %19 = sbr.rel (0) target = $region9
    $region8: #{tpu_custom_call.1} parent=1 // pred_region
      %20 = dma.done [#allocation3], 256
    $region9: #{tpu_custom_call.1} parent=1 // pred_fallthru
      _
    %v23 = vld [vmem:[#allocation2] sm:$0xff]
    %v24 = vld [vmem:[#allocation2 + $0x8] sm:$0xff]
    %vm25 = vcmp.eq.s32.totalorder %v23, 3
    %vm26 = vcmp.eq.s32.totalorder %v24, 3
    %vm27 = vmpackc.low %vm25, %vm25
    %vm28 = vmpackc.even %vm27, %vm27
    %vm29 = vmpackc.low %vm26, %vm26
    %vm30 = vmpackc.even %vm29, %vm29
    %v31 = vsel %vm28, 16843009, 0
    %v32 = vsel %vm30, 16843009, 0
    %v33 = vunpack.c.0.s8 %v31
    %v34 = vunpack.c.0.s8 %v32
    %v35 = vpack.c.b16 %v34, %v33
    %v36 = vpack.c.b8 %v35, %v35
    %37 = vst [vmem:[#allocation5] sm:$0xf] %v36
    // Predicated region
    $region10: #{tpu_custom_call.1} parent=1 // pred_check
      _
    $region11: #{tpu_custom_call.1} parent=1 // pred_check_branch
      %39 = sbr.rel (0) target = $region13
    $region12: #{tpu_custom_call.1} parent=1 // pred_region
      %s41 = ssub.s32 64, 64
      %42 = vsyncadd [#allocation4], %s41
      %s44 = sshll.u32 [#allocation5], 4
      %s45 = int_to_ptr.vmem [resolvable:$true] %s44
      %47 = dma.vmem_to_hbm [thread:$0]  %s45, 64, %s1, [#allocation4]
    $region13: #{tpu_custom_call.1} parent=1 // pred_fallthru
      _
    // Predicated region
    $region14: #{tpu_custom_call.1} parent=1 // pred_check
      _
    $region15: #{tpu_custom_call.1} parent=1 // pred_check_branch
      %49 = sbr.rel (0) target = $region17
    $region16: #{tpu_custom_call.1} parent=1 // pred_region
      %50 = dma.done [#allocation4], 64
    $region17: #{tpu_custom_call.1} parent=1 // pred_fallthru
      _
    %51 = vsyncpa [#allocation3], 1
    %52 = vsyncpa [#allocation4], 1

</llo_original>
